<compile_context>
chip_gen: v7x
topology: tpu7x:2x2x1
jax: 0.10.0
libtpu: 0.0.40
codegen_flags: <defaults>
</compile_context>

<pallas_src>
import math

import jax
import jax.numpy as jnp
import numpy as np
from jax import lax
from jax.experimental import pallas as pl
from jax.experimental.pallas import tpu as pltpu


def _round_up(x, m):
    return (x + m - 1) // m * m


def _patch_embed_kernel(x_ref, w_ref, b_ref, o_ref):
    """x_ref: [TT, Kp] bf16, w_ref: [Kp, OCp] bf16, b_ref: [1, OCp] f32,
    o_ref: [TT, OCp].  One MXU matmul (f32 accumulation) + bias add."""
    acc = jnp.dot(x_ref[...], w_ref[...], preferred_element_type=jnp.float32)
    o_ref[...] = (acc + b_ref[...]).astype(o_ref.dtype)


def patch_embed_forward(x, mask, dw_weight, dw_bias, proj_weight, *, stride,
                        has_mask=False, block_tokens=1024, out_dtype=None,
                        vmem_limit_bytes=None):
    """Pallas implementation of PatchEmbed.forward.

    Args:
      x:           [B, C, H, W]   (NCHW, same as PyTorch)
      mask:        [B, 1, H, W] or None
      dw_weight:   [C, 1, 3, 3]   depthwise Conv2d weight (PyTorch layout)
      dw_bias:     [C]            depthwise Conv2d bias
      proj_weight: [OC, C]        nn.Linear weight (PyTorch layout, no bias)
      stride:      conv stride
      block_tokens: target tokens per grid step (tile-size sweep knob;
                    ~1024 is safe on v7x, sweep up to 4096-8192 on v6e)
      out_dtype:   output dtype (defaults to x.dtype; pass bf16 to halve
                    writeback if downstream accepts it)
    Returns:
      (out [B, H_out*W_out, OC], H_out, W_out, mask [B,1,H_out,W_out]|None)
    """
    B, C, H, W = x.shape
    OC = proj_weight.shape[0]
    s = int(stride)
    H_out = (H + 2 - 3) // s + 1
    W_out = (W + 2 - 3) // s + 1
    N = H_out * W_out

    K = 9 * C                     # 3x3 taps folded into the contraction axis
    Kp = _round_up(K, 128)        # lane-dense contraction dim (>=128)
    OCp = _round_up(OC, 128)      # lane-dense output dim (only up to 128 pad)
    out_dtype = x.dtype if out_dtype is None else out_dtype

    # Row-band token tiling: TH whole output rows per grid step so the token
    # padding is absorbed into the image zero padding.  TT = TH*W_out must be
    # a multiple of 8 (sublane) unless the band covers everything.
    TH = max(1, block_tokens // W_out)
    TH = _round_up(TH, 8 // math.gcd(W_out, 8))
    if TH >= H_out:
        TH, T = H_out, 1
    else:
        T = -(-H_out // TH)
    H_out_p = T * TH
    TT = TH * W_out
    N_pad = H_out_p * W_out

    # ---- wrapper: zero-pad + fold 3x3 taps into the channel/K axis ---------
    x_nhwc = jnp.transpose(x, (0, 2, 3, 1)).astype(jnp.bfloat16)  # [B,H,W,C]
    Hp = (H_out_p - 1) * s + 3
    Wp = (W_out - 1) * s + 3
    xp = jnp.pad(x_nhwc, ((0, 0),
                          (1, max(Hp - (H + 1), 0)),
                          (1, max(Wp - (W + 1), 0)),
                          (0, 0)))[:, :Hp, :Wp, :]                # [B,Hp,Wp,C]
    taps = [xp[:, ky:ky + (H_out_p - 1) * s + 1:s,
               kx:kx + (W_out - 1) * s + 1:s, :]
            for ky in range(3) for kx in range(3)]    # 9 x [B,H_out_p,W_out,C]
    if Kp > K:
        taps.append(jnp.zeros((B, H_out_p, W_out, Kp - K), jnp.bfloat16))
    xcol = jnp.concatenate(taps, axis=-1).reshape(B, N_pad, Kp)   # bf16

    # ---- fold the depthwise 3x3 conv into the projection weight ------------
    pw = jnp.transpose(proj_weight).astype(jnp.float32)           # [C, OC]
    dw = dw_weight.reshape(C, 9).astype(jnp.float32)              # [C, (ky,kx)]
    wf = (jnp.transpose(dw)[:, :, None] * pw[None, :, :]).reshape(K, OC)
    wf = jnp.pad(wf, ((0, Kp - K), (0, OCp - OC))).astype(jnp.bfloat16)
    bf = jnp.pad(dw_bias.astype(jnp.float32) @ pw,
                 (0, OCp - OC)).reshape(1, OCp)                   # [1,OCp] f32

    # ---- VMEM budget / cost hints ------------------------------------------
    out_isize = jnp.dtype(out_dtype).itemsize
    if vmem_limit_bytes is None:
        need = (2 * (TT * Kp * 2 + Kp * OCp * 2 + TT * OCp * out_isize)
                + OCp * 4 + TT * OCp * 4)            # + f32 accumulator temp
        vmem_limit_bytes = min(48 * 1024 * 1024,
                               max(32 * 1024 * 1024, 2 * need))
    flops = 2 * B * N_pad * Kp * OCp
    bytes_accessed = (xcol.size * 2 + wf.size * 2 + bf.size * 4
                      + B * N_pad * OCp * out_isize)

    out = pl.pallas_call(
        _patch_embed_kernel,
        out_shape=jax.ShapeDtypeStruct((B, N_pad, OCp), out_dtype),
        grid=(B, T),
        in_specs=[
            pl.BlockSpec((None, TT, Kp), lambda b, t: (b, t, 0)),
            # Constant index_map: the weight/bias blocks stay resident across
            # grid steps (no re-DMA).  pl.Buffered(1) would additionally halve
            # their VMEM footprint; default double-buffering is kept as the
            # safe/portable choice and fits easily at these tile sizes.
            pl.BlockSpec((Kp, OCp), lambda b, t: (0, 0)),
            pl.BlockSpec((1, OCp), lambda b, t: (0, 0)),
        ],
        out_specs=pl.BlockSpec((None, TT, OCp), lambda b, t: (b, t, 0)),
        compiler_params=pltpu.CompilerParams(
            dimension_semantics=("parallel", "parallel"),
            vmem_limit_bytes=int(vmem_limit_bytes)),
        cost_estimate=pl.CostEstimate(flops=int(flops), transcendentals=0,
                                      bytes_accessed=int(bytes_accessed)),
    )(xcol, wf, bf)

    out = out[:, :N, :OC]          # crop padded tokens / padded channels

    # ---- mask handling (matches PatchEmbed.process_mask), plain JAX --------
    if mask is None and has_mask:
        mask = jnp.zeros((1, 1, H_out, W_out), x.dtype)
    if mask is not None and mask.shape[-2:] != (H_out, W_out):
        # TODO(synk): F.interpolate(mode='nearest') has no Pallas win; kept in JAX.
        mask = jax.image.resize(
            mask, mask.shape[:2] + (H_out, W_out), method="nearest")
    return out, H_out, W_out, mask


def reference_forward(x, dw_weight, dw_bias, proj_weight, stride):
    """Pure-JAX f32 reference matching the PyTorch module semantics."""
    s = stride
    out = lax.conv_general_dilated(
        x, dw_weight, window_strides=(s, s), padding=((1, 1), (1, 1)),
        feature_group_count=x.shape[1],
        dimension_numbers=("NCHW", "OIHW", "NCHW"))
    out = out + dw_bias[None, :, None, None]
    B, C, Ho, Wo = out.shape
    tokens = jnp.transpose(out, (0, 2, 3, 1)).reshape(B, Ho * Wo, C)
    return tokens @ proj_weight.T, Ho, Wo


if __name__ == "__main__":
    B, C, H, W = 2, 4, 16, 16      # x: [B, in_ch, H, W]
    OC = 32                        # out_ch
    stride = 2

    key = jax.random.PRNGKey(0)
    k1, k2, k3, k4 = jax.random.split(key, 4)
    x = jax.random.normal(k1, (B, C, H, W), jnp.float32)
    dw_weight = 0.1 * jax.random.normal(k2, (C, 1, 3, 3), jnp.float32)
    dw_bias = 0.1 * jax.random.normal(k3, (C,), jnp.float32)
    proj_weight = 0.1 * jax.random.normal(k4, (OC, C), jnp.float32)

    out, Ho, Wo, mask = patch_embed_forward(
        x, None, dw_weight, dw_bias, proj_weight,
        stride=stride, has_mask=False)
    out = jax.block_until_ready(out)

    ref, Hr, Wr = reference_forward(x, dw_weight, dw_bias, proj_weight, stride)
    assert (Ho, Wo) == (Hr, Wr) and out.shape == (B, Ho * Wo, OC)
    # Tolerance relaxed vs the f32 reference because activations and the
    # fused (dw x proj) weight are fed to the MXU in bf16 (f32 accumulation).
    np.testing.assert_allclose(np.asarray(out), np.asarray(ref),
                               rtol=2e-2, atol=1e-2)
    print("KERNEL_OK")
</pallas_src>

<mosaic_0001>
module attributes {stable_mosaic.version = 11 : i64} {
  func.func @_patch_embed_kernel(%arg0: i32, %arg1: i32, %arg2: memref<1x64x128xbf16, #tpu.memory_space<vmem>>, %arg3: memref<128x128xbf16, #tpu.memory_space<vmem>>, %arg4: memref<1x128xf32, #tpu.memory_space<vmem>>, %arg5: memref<1x64x128xf32, #tpu.memory_space<vmem>>) attributes {dimension_semantics = [#tpu.dimension_semantics<parallel>, #tpu.dimension_semantics<parallel>], iteration_bounds = array<i64: 2, 1>, scalar_prefetch = 0 : i64, scratch_operands = 0 : i64, tpu.core_type = #tpu.core_type<tc>, window_params = [{transform_indices = @transform_0, window_bounds = array<i64: 1, 64, 128>}, {pipeline_mode = #tpu.pipeline_mode<synchronous>, transform_indices = @transform_1, window_bounds = array<i64: 128, 128>}, {pipeline_mode = #tpu.pipeline_mode<synchronous>, transform_indices = @transform_2, window_bounds = array<i64: 1, 128>}, {transform_indices = @transform_3, window_bounds = array<i64: 1, 64, 128>}]} {
    %c0 = arith.constant 0 : index
    %c0_0 = arith.constant 0 : index
    %c0_1 = arith.constant 0 : index
    %0 = vector.load %arg2[%c0, %c0_0, %c0_1] : memref<1x64x128xbf16, #tpu.memory_space<vmem>>, vector<1x64x128xbf16>
    %1 = vector.shape_cast %0 : vector<1x64x128xbf16> to vector<64x128xbf16>
    %c0_2 = arith.constant 0 : index
    %c0_3 = arith.constant 0 : index
    %2 = vector.load %arg3[%c0_2, %c0_3] : memref<128x128xbf16, #tpu.memory_space<vmem>>, vector<128x128xbf16>
    %cst = arith.constant dense<0.000000e+00> : vector<64x128xf32>
    %3 = tpu.matmul %1, %2, %cst {dimension_numbers = #tpu.dot_dimension_numbers<[1], [0], [0], [1], [0, 0, 1, 1], [], []>} : vector<64x128xbf16>, vector<128x128xbf16>, vector<64x128xf32> -> vector<64x128xf32>
    %c0_4 = arith.constant 0 : index
    %c0_5 = arith.constant 0 : index
    %4 = vector.load %arg4[%c0_4, %c0_5] : memref<1x128xf32, #tpu.memory_space<vmem>>, vector<1x128xf32>
    %5 = vector.broadcast %4 : vector<1x128xf32> to vector<64x128xf32>
    %6 = arith.addf %3, %5 : vector<64x128xf32>
    %c0_6 = arith.constant 0 : index
    %c0_7 = arith.constant 0 : index
    %c0_8 = arith.constant 0 : index
    %7 = vector.load %arg5[%c0_6, %c0_7, %c0_8] : memref<1x64x128xf32, #tpu.memory_space<vmem>>, vector<1x64x128xf32>
    %8 = vector.shape_cast %7 : vector<1x64x128xf32> to vector<64x128xf32>
    %9 = vector.shape_cast %6 : vector<64x128xf32> to vector<1x64x128xf32>
    tpu.vector_store %arg5[%c0_6, %c0_7, %c0_8], %9 {strides = array<i32>} : memref<1x64x128xf32, #tpu.memory_space<vmem>>, vector<1x64x128xf32>,
    return
  }
  func.func @transform_0(%arg0: i32, %arg1: i32) -> (i32, i32, i32) {
    %c0_i32 = arith.constant 0 : i32
    %c0_i32_0 = arith.constant 0 : i32
    return %arg0, %arg1, %c0_i32 : i32, i32, i32
  }
  func.func @transform_1(%arg0: i32, %arg1: i32) -> (i32, i32) {
    %c0_i32 = arith.constant 0 : i32
    %c0_i32_0 = arith.constant 0 : i32
    %c0_i32_1 = arith.constant 0 : i32
    return %c0_i32, %c0_i32_0 : i32, i32
  }
  func.func @transform_2(%arg0: i32, %arg1: i32) -> (i32, i32) {
    %c0_i32 = arith.constant 0 : i32
    %c0_i32_0 = arith.constant 0 : i32
    %c0_i32_1 = arith.constant 0 : i32
    return %c0_i32, %c0_i32_0 : i32, i32
  }
  func.func @transform_3(%arg0: i32, %arg1: i32) -> (i32, i32, i32) {
    %c0_i32 = arith.constant 0 : i32
    %c0_i32_0 = arith.constant 0 : i32
    return %arg0, %arg1, %c0_i32 : i32, i32, i32
  }
}

</mosaic_0001>

<llo_original>
// kernel: tpu_custom_call.1
$region0: #{tpu_custom_call.1}
  #allocation0 [shape = 'u32[]', space=smem, size = 0x4, offset = 0x4, fixed_abs, tag = 'smem constant byte address 0x4 - core index']
  #allocation1 [shape = 'u32[144,128]{1,0:T(1,128)}', space=vmem, size = 0x12000, scoped, tag = 'internal scratch']
  %s0 = inlined_call_operand.hbm [shape: bf16[2,64,128], index: 0, kind: input, shape index: {}]
  %s1 = inlined_call_operand.hbm [shape: bf16[128,128], index: 1, kind: input, shape index: {}]
  %s2 = inlined_call_operand.vmem [shape: f32[1,128], index: 2, kind: input, shape index: {}]
  %s3 = inlined_call_operand.hbm [shape: f32[2,64,128], index: 3, kind: output, shape index: {}]
  %s4 = sld [smem:[#allocation0]]
  $region53: #{tpu_custom_call.1} parent=0
    _
  %s6 = ssub.s32 1, %s4
  %s7 = scalar_select 0, %s6, %s4
  $region1: #{tpu_custom_call.1} parent=0
    #allocation2 [shape = 'u8[32768]{0}', space=vmem, size = 0x8000, scoped, tag = 'input window, operand 0']
    #allocation3 [shape = 's32[2]{0}', space=sflag, size = 0x8, scoped, tag = 'scoped memory for tpu_custom_call.1']
    #allocation4 [shape = 's32[2]{0}', space=sflag, size = 0x8, scoped, tag = 'scoped memory for tpu_custom_call.1']
    #allocation5 [shape = 'u8[32768]{0}', space=vmem, size = 0x8000, scoped, tag = 'input window, operand 1, single buffered']
    #allocation6 [shape = 's32[1]{0}', space=sflag, size = 0x4, scoped, tag = 'scoped memory for tpu_custom_call.1']
    #allocation7 [shape = 'u8[65536]{0}', space=vmem, size = 0x10000, scoped, tag = 'output window, operand 0']
    %8 = vsyncpa [#allocation3], 0
    %s9 = scalar_lea.sflag [#allocation3], 1
    %10 = vsyncpa %s9, 0
    %11 = vsyncpa [#allocation6], 0
    %12 = vsyncpa [#allocation4], 0
    %s13 = scalar_lea.sflag [#allocation4], 1
    %14 = vsyncpa %s13, 0
    loop: start=0, step=1, limit=4
    $region2: #{tpu_custom_call.1} parent=1 // loop_pre_header
      _
    $region3: #{tpu_custom_call.1} parent=1 // loop_header
      %s16 = sphi 0, %s20
      %p17 = scmp.ge.s32.totalorder %s16, 4
      %s23 = sphi 0, %s35
      %s24 = sphi 0, %s31
      %s25 = sphi 0, %s23
      %s26 = sphi 0, %s24
      %s27 = sphi 0, %s25
      %s28 = sphi 0, %s26
      %s40 = sphi 0, %s42
      %s43 = sphi 0, %s40
      %s44 = sphi 0, %s43
      %s60 = sphi 0, %s44
      %s64 = sphi 0, %s64
      %s66 = sphi 0, %s64
      %s67 = sphi 0, %s66
      %s81 = sphi 0, %s67
      %s85 = sphi 0, %s85
      %s87 = sphi 0, %s85
      %s88 = sphi 0, %s87
      %s102 = sphi 0, %s88
      %s110 = sphi 0, %s112
      %s113 = sphi 0, %s110
      %s114 = sphi 0, %s113
      %s130 = sphi 0, %s114
    $region4: #{tpu_custom_call.1} parent=1 // loop_header_branch
      %19 = sbr.rel (%p17) target = $region8
    $region5: #{tpu_custom_call.1} parent=1 // loop_body
      %s21 = ssub.s32 %s16, 1
      %s22 = ssub.s32 %s16, 2
      %s29 = sadd.s32 1, %s24
      %p30 = scmp.ge.s32.totalorder %s29, 1
      %s31 = scalar_select %p30, 0, %s29
      %s32 = sadd.s32 1, %s23
      %s33 = scalar_select %p30, %s32, %s23
      %p34 = scmp.ge.s32.totalorder %s33, 2
      %s35 = scalar_select %p34, 0, %s33
      %s36 = ssub.s32 %s23, %s35
      %s37 = ssub.s32 %s24, %s31
      %s38 = sor.u32 %s36, %s37
      %p39 = scmp.eq.s32.totalorder %s38, 0
      %s41 = sadd.s32 %s40, 1
      %s42 = scalar_select %p39, %s40, %s41
      %p45 = pneg %p39
      %p46 = scmp.eq.s32.totalorder %s16, 1
      %p47 = por %p45, %p46
      %p48 = scmp.ne.s32.totalorder %s40, %s43
      %p49 = scmp.eq.s32.totalorder %s16, 0
      %p50 = por %p48, %p49
      %p51 = scmp.ne.s32.totalorder %s40, %s43
      %p52 = scmp.eq.s32.totalorder %s21, 1
      %p53 = por %p51, %p52
      %p54 = scmp.ne.s32.totalorder %s43, %s44
      %p55 = scmp.eq.s32.totalorder %s21, 0
      %p56 = por %p54, %p55
      %p57 = scmp.ne.s32.totalorder %s43, %s44
      %p58 = scmp.eq.s32.totalorder %s22, 1
      %p59 = por %p57, %p58
      %p61 = scmp.ne.s32.totalorder %s44, %s60
      %p62 = scmp.eq.s32.totalorder %s22, 0
      %p63 = por %p61, %p62
      %s65 = sadd.s32 %s64, 1
      %p68 = scmp.eq.s32.totalorder %s16, 1
      %p69 = scmp.ne.s32.totalorder %s64, %s66
      %p70 = scmp.eq.s32.totalorder %s16, 0
      %p71 = por %p69, %p70
      %p72 = scmp.ne.s32.totalorder %s64, %s66
      %p73 = scmp.eq.s32.totalorder %s21, 1
      %p74 = por %p72, %p73
      %p75 = scmp.ne.s32.totalorder %s66, %s67
      %p76 = scmp.eq.s32.totalorder %s21, 0
      %p77 = por %p75, %p76
      %p78 = scmp.ne.s32.totalorder %s66, %s67
      %p79 = scmp.eq.s32.totalorder %s22, 1
      %p80 = por %p78, %p79
      %p82 = scmp.ne.s32.totalorder %s67, %s81
      %p83 = scmp.eq.s32.totalorder %s22, 0
      %p84 = por %p82, %p83
      %s86 = sadd.s32 %s85, 1
      %p89 = scmp.eq.s32.totalorder %s16, 1
      %p90 = scmp.ne.s32.totalorder %s85, %s87
      %p91 = scmp.eq.s32.totalorder %s16, 0
      %p92 = por %p90, %p91
      %p93 = scmp.ne.s32.totalorder %s85, %s87
      %p94 = scmp.eq.s32.totalorder %s21, 1
      %p95 = por %p93, %p94
      %p96 = scmp.ne.s32.totalorder %s87, %s88
      %p97 = scmp.eq.s32.totalorder %s21, 0
      %p98 = por %p96, %p97
      %p99 = scmp.ne.s32.totalorder %s87, %s88
      %p100 = scmp.eq.s32.totalorder %s22, 1
      %p101 = por %p99, %p100
      %p103 = scmp.ne.s32.totalorder %s88, %s102
      %p104 = scmp.eq.s32.totalorder %s22, 0
      %p105 = por %p103, %p104
      %s106 = ssub.s32 %s23, %s35
      %s107 = ssub.s32 %s24, %s31
      %s108 = sor.u32 %s106, %s107
      %p109 = scmp.eq.s32.totalorder %s108, 0
      %s111 = sadd.s32 %s110, 1
      %s112 = scalar_select %p109, %s110, %s111
      %p115 = pneg %p109
      %p116 = scmp.eq.s32.totalorder %s16, 1
      %p117 = por %p115, %p116
      %p118 = scmp.ne.s32.totalorder %s110, %s113
      %p119 = scmp.eq.s32.totalorder %s16, 0
      %p120 = por %p118, %p119
      %p121 = scmp.ne.s32.totalorder %s110, %s113
      %p122 = scmp.eq.s32.totalorder %s21, 1
      %p123 = por %p121, %p122
      %p124 = scmp.ne.s32.totalorder %s113, %s114
      %p125 = scmp.eq.s32.totalorder %s21, 0
      %p126 = por %p124, %p125
      %p127 = scmp.ne.s32.totalorder %s113, %s114
      %p128 = scmp.eq.s32.totalorder %s22, 1
      %p129 = por %p127, %p128
      %p131 = scmp.ne.s32.totalorder %s114, %s130
      %p132 = scmp.eq.s32.totalorder %s22, 0
      %p133 = por %p131, %p132
      %p134 = scmp.le.s32.totalorder 1, %s16
      %p135 = scmp.lt.s32.totalorder %s16, 3
      %p136 = pnand %p134, %p135
      %p137 = pneg %p136
      // Predicated region
      $region9: #{tpu_custom_call.1} parent=5 // pred_check
        _
      $region10: #{tpu_custom_call.1} parent=5 // pred_check_branch
        %139 = sbr.rel (%p136) target = $region12
      $region11: #{tpu_custom_call.1} parent=5 // pred_region
        %s140 = ssub.s32 %s16, 1
        // Predicated region
        $region13: #{tpu_custom_call.1} parent=11 // pred_check
          %p141 = pneg %p77
        $region14: #{tpu_custom_call.1} parent=11 // pred_check_branch
          %143 = sbr.rel (%p141) target = $region16
        $region15: #{tpu_custom_call.1} parent=11 // pred_region
          %s145 = ssub.s32 1024, 1024
          %146 = vsyncadd [#allocation6], %s145
          %s147 = sshll.u32 [#allocation5], 4
          %s148 = int_to_ptr.vmem [resolvable:$true] %s147
          %153 = dma.hbm_to_vmem [thread:$0]  %s1, 1024, %s148, [#allocation6], 64, 64, 4
        $region16: #{tpu_custom_call.1} parent=11 // pred_fallthru
          _
        // Predicated region
        $region17: #{tpu_custom_call.1} parent=11 // pred_check
          %p154 = pneg %p98
        $region18: #{tpu_custom_call.1} parent=11 // pred_check_branch
          %156 = sbr.rel (%p154) target = $region20
        $region19: #{tpu_custom_call.1} parent=11 // pred_region
          _
        $region20: #{tpu_custom_call.1} parent=11 // pred_fallthru
          _
      $region12: #{tpu_custom_call.1} parent=5 // pred_fallthru
        _
      %p157 = scmp.lt.s32.totalorder %s16, 2
      // Predicated region
      $region21: #{tpu_custom_call.1} parent=5 // pred_check
        %p158 = pneg %p157
      $region22: #{tpu_custom_call.1} parent=5 // pred_check_branch
        %160 = sbr.rel (%p158) target = $region24
      $region23: #{tpu_custom_call.1} parent=5 // pred_region
        // Predicated region
        $region25: #{tpu_custom_call.1} parent=23 // pred_check
          %p161 = pneg %p50
        $region26: #{tpu_custom_call.1} parent=23 // pred_check_branch
          %163 = sbr.rel (%p161) target = $region28
        $region27: #{tpu_custom_call.1} parent=23 // pred_region
          %s164 = sand.u32 %s40, 1
          %s165 = scalar_lea.sflag [#allocation3], %s164
          %s166 = sand.u32 %s40, 1
          %s167 = smul.addr %s166, 32
          %s168 = scalar_lea.vmem [#allocation2], %s167
          %s169 = smul.u32 8, %s24
          %s171 = ssub.s32 512, 512
          %172 = vsyncadd %s165, %s171
          %s173 = smul.addr %s23, 8
          %s174 = sadd.s32 %s169, %s173
          %s175 = smul.addr %s174, 64
          %s176 = scalar_lea.hbm %s0, %s175
          %s177 = sshll.u32 %s168, 4
          %s178 = int_to_ptr.vmem [resolvable:$true] %s177
          %183 = dma.hbm_to_vmem [thread:$0]  %s176, 512, %s178, %s165, 64, 64, 4
        $region28: #{tpu_custom_call.1} parent=23 // pred_fallthru
          _
      $region24: #{tpu_custom_call.1} parent=5 // pred_fallthru
        _
      %p184 = scmp.le.s32.totalorder 1, %s16
      %p185 = scmp.lt.s32.totalorder %s16, 3
      %p186 = pnand %p184, %p185
      %p187 = pneg %p186
      // Predicated region
      $region29: #{tpu_custom_call.1} parent=5 // pred_check
        _
      $region30: #{tpu_custom_call.1} parent=5 // pred_check_branch
        %189 = sbr.rel (%p186) target = $region32
      $region31: #{tpu_custom_call.1} parent=5 // pred_region
        %s190 = ssub.s32 %s16, 1
        %s191 = sand.u32 %s43, 1
        %s192 = scalar_lea.sflag [#allocation3], %s191
        %s193 = sand.u32 %s43, 1
        %s194 = smul.addr %s193, 32
        %s195 = scalar_lea.vmem [#allocation2], %s194
        // Predicated region
        $region33: #{tpu_custom_call.1} parent=31 // pred_check
          %p196 = pneg %p56
        $region34: #{tpu_custom_call.1} parent=31 // pred_check_branch
          %198 = sbr.rel (%p196) target = $region36
        $region35: #{tpu_custom_call.1} parent=31 // pred_region
          %199 = dma.done %s192, 512
        $region36: #{tpu_custom_call.1} parent=31 // pred_fallthru
          _
        // Predicated region
        $region37: #{tpu_custom_call.1} parent=31 // pred_check
          %p200 = pneg %p77
        $region38: #{tpu_custom_call.1} parent=31 // pred_check_branch
          %202 = sbr.rel (%p200) target = $region40
        $region39: #{tpu_custom_call.1} parent=31 // pred_region
          %203 = dma.done [#allocation6], 1024
        $region40: #{tpu_custom_call.1} parent=31 // pred_fallthru
          _
        %s204 = sand.u32 %s43, 1
        %s205 = scalar_lea.sflag [#allocation3], %s204
        %s206 = sand.u32 %s43, 1
        %s207 = smul.addr %s206, 32
        %s208 = scalar_lea.vmem [#allocation2], %s207
        %p209 = pneg %p56
        %p210 = pneg %p53
        %p211 = pneg %p77
        %p212 = pneg %p74
        %p213 = pneg %p98
        %p214 = pneg %p95
        %p215 = pneg %p126
        %p216 = pneg %p123
        %s217 = sand.u32 %s113, 1
        %s218 = scalar_lea.sflag [#allocation4], %s217
        %s219 = sand.u32 %s113, 1
        %s220 = smul.addr %s219, 64
        %s221 = scalar_lea.vmem [#allocation7], %s220
        %s222 = smul.u32 8, %s26
        %s223 = smul.u32 8, %s26
        %v225 = vld [vmem:[%s195] sm:$0xf]
        %v226 = vld [vmem:[%s195 + $0x4] sm:$0xf]
        %v227 = vld [vmem:[%s195 + $0x8] sm:$0xf]
        %v228 = vld [vmem:[%s195 + $0xc] sm:$0xf]
        %v229 = vld [vmem:[%s195 + $0x10] sm:$0xf]
        %v230 = vld [vmem:[%s195 + $0x14] sm:$0xf]
        %v231 = vld [vmem:[%s195 + $0x18] sm:$0xf]
        %v232 = vld [vmem:[%s195 + $0x1c] sm:$0xf]
        %v233 = vld [vmem:[#allocation5] sm:$0xf]
        %v234 = vld [vmem:[#allocation5 + $0x4] sm:$0xf]
        %v235 = vld [vmem:[#allocation5 + $0x8] sm:$0xf]
        %v236 = vld [vmem:[#allocation5 + $0xc] sm:$0xf]
        %v237 = vld [vmem:[#allocation5 + $0x10] sm:$0xf]
        %v238 = vld [vmem:[#allocation5 + $0x14] sm:$0xf]
        %v239 = vld [vmem:[#allocation5 + $0x18] sm:$0xf]
        %v240 = vld [vmem:[#allocation5 + $0x1c] sm:$0xf]
        %v241 = vld [vmem:[#allocation5 + $0x20] sm:$0xf]
        %v242 = vld [vmem:[#allocation5 + $0x24] sm:$0xf]
        %v243 = vld [vmem:[#allocation5 + $0x28] sm:$0xf]
        %v244 = vld [vmem:[#allocation5 + $0x2c] sm:$0xf]
        %v245 = vld [vmem:[#allocation5 + $0x30] sm:$0xf]
        %v246 = vld [vmem:[#allocation5 + $0x34] sm:$0xf]
        %v247 = vld [vmem:[#allocation5 + $0x38] sm:$0xf]
        %v248 = vld [vmem:[#allocation5 + $0x3c] sm:$0xf]
        %v249 = vld [vmem:[%s2] sm:$0x1]
        %v251 = vlaneseq
        %v252 = vshrl.u32 %v251, 7
        %v253 = vsub.s32 0, %v252
        %v254 = vrot.slane %v249, %v253
        %v264 = vunpack.c.l.b16 %v225
        %v265 = vunpack.c.l.b16 %v226
        %v266 = vunpack.c.l.b16 %v227
        %v267 = vunpack.c.l.b16 %v228
        %v268 = vunpack.c.l.b16 %v229
        %v269 = vunpack.c.l.b16 %v230
        %v270 = vunpack.c.l.b16 %v231
        %v271 = vunpack.c.l.b16 %v232
        %v272 = vpack.c.b16 %v265, %v264
        %v273 = vpack.c.b16 %v267, %v266
        %v274 = vpack.c.b16 %v269, %v268
        %v275 = vpack.c.b16 %v271, %v270
        %v296 = vunpack.c.l.b16 %v233
        %v297 = vunpack.c.l.b16 %v234
        %v298 = vunpack.c.l.b16 %v235
        %v299 = vunpack.c.l.b16 %v236
        %v300 = vunpack.c.l.b16 %v237
        %v301 = vunpack.c.l.b16 %v238
        %v302 = vunpack.c.l.b16 %v239
        %v303 = vunpack.c.l.b16 %v240
        %v304 = vunpack.c.l.b16 %v241
        %v305 = vunpack.c.l.b16 %v242
        %v306 = vunpack.c.l.b16 %v243
        %v307 = vunpack.c.l.b16 %v244
        %v308 = vunpack.c.l.b16 %v245
        %v309 = vunpack.c.l.b16 %v246
        %v310 = vunpack.c.l.b16 %v247
        %v311 = vunpack.c.l.b16 %v248
        %v312 = vpack.c.b16 %v297, %v296
        %v313 = vpack.c.b16 %v299, %v298
        %v314 = vpack.c.b16 %v301, %v300
        %v315 = vpack.c.b16 %v303, %v302
        %v316 = vpack.c.b16 %v305, %v304
        %v317 = vpack.c.b16 %v307, %v306
        %v318 = vpack.c.b16 %v309, %v308
        %v319 = vpack.c.b16 %v311, %v310
        %328 = vmatprep.subr.bf16.mxu0 0
        %329 = vmatpush1.bf16.msra.mxu0 %v312
        %330 = vmatprep.subr.bf16.mxu0 0
        %331 = vmatpush1.bf16.msra.mxu0 %v313
        %332 = vmatprep.subr.bf16.mxu0 0
        %333 = vmatpush1.bf16.msra.mxu0 %v314
        %334 = vmatprep.subr.bf16.mxu0 0
        %335 = vmatpush1.bf16.msra.mxu0 %v315
        %336 = vmatprep.subr.bf16.mxu0 0
        %337 = vmatpush1.bf16.msra.mxu0 %v316
        %338 = vmatprep.subr.bf16.mxu0 0
        %339 = vmatpush1.bf16.msra.mxu0 %v317
        %340 = vmatprep.subr.bf16.mxu0 0
        %341 = vmatpush1.bf16.msra.mxu0 %v318
        %342 = vmatprep.subr.bf16.mxu0 0
        %343 = vmatpush1.bf16.msra.mxu0 %v319
        %344 = vmatprep.subr.bf16.mxu0 0
        %345 = vmatpush1.bf16.msra.mxu0 0
        %346 = vmatprep.subr.bf16.mxu0 0
        %347 = vmatpush1.bf16.msra.mxu0 0
        %348 = vmatprep.subr.bf16.mxu0 0
        %349 = vmatpush1.bf16.msra.mxu0 0
        %350 = vmatprep.subr.bf16.mxu0 0
        %351 = vmatpush1.bf16.msra.mxu0 0
        %352 = vmatprep.subr.bf16.mxu0 0
        %353 = vmatpush1.bf16.msra.mxu0 0
        %354 = vmatprep.subr.bf16.mxu0 0
        %355 = vmatpush1.bf16.msra.mxu0 0
        %356 = vmatprep.subr.bf16.mxu0 0
        %357 = vmatpush1.bf16.msra.mxu0 0
        %358 = vmatprep.subr.bf16.mxu0 0
        %359 = vmatpush1.bf16.msra.mxu0 0
        %360 = vmatprep.mubr.bf16.mxu0 0
        %361 = vmatmul.mubr.bf16.gmra.mrb[0].mxu0 %v272
        %v362 = vpop.f32.mrb[0].mxu0
        %v363 = vadd.f32 %v254, %v362
        %v364 = vpop.f32.mrb[0].mxu0
        %v365 = vpop.f32.mrb[0].mxu0
        %v366 = vadd.f32 %v254, %v365
        %v367 = vpop.f32.mrb[0].mxu0
        %368 = vmatprep.mubr.bf16.mxu0 0
        %369 = vmatmul.mubr.bf16.gmra.mrb[0].mxu0 %v273
        %v370 = vpop.f32.mrb[0].mxu0
        %v371 = vadd.f32 %v254, %v370
        %v372 = vpop.f32.mrb[0].mxu0
        %v373 = vpop.f32.mrb[0].mxu0
        %v374 = vadd.f32 %v254, %v373
        %v375 = vpop.f32.mrb[0].mxu0
        %376 = vmatprep.mubr.bf16.mxu0 0
        %377 = vmatmul.mubr.bf16.gmra.mrb[0].mxu0 %v274
        %v378 = vpop.f32.mrb[0].mxu0
        %v379 = vadd.f32 %v254, %v378
        %v380 = vpop.f32.mrb[0].mxu0
        %v381 = vpop.f32.mrb[0].mxu0
        %v382 = vadd.f32 %v254, %v381
        %v383 = vpop.f32.mrb[0].mxu0
        %384 = vmatprep.mubr.bf16.mxu0 0
        %385 = vmatmul.mubr.bf16.gmra.mrb[0].mxu0 %v275
        %v386 = vpop.f32.mrb[0].mxu0
        %v387 = vadd.f32 %v254, %v386
        %v388 = vpop.f32.mrb[0].mxu0
        %v389 = vpop.f32.mrb[0].mxu0
        %v390 = vadd.f32 %v254, %v389
        %v391 = vpop.f32.mrb[0].mxu0
        %392 = vdwg.mxu0
        %393 = vst [vmem:[%s221] sm:$0xff] %v363
        %394 = vst [vmem:[%s221 + $0x8] sm:$0xff] %v366
        %395 = vst [vmem:[%s221 + $0x10] sm:$0xff] %v371
        %396 = vst [vmem:[%s221 + $0x18] sm:$0xff] %v374
        %397 = vst [vmem:[%s221 + $0x20] sm:$0xff] %v379
        %398 = vst [vmem:[%s221 + $0x28] sm:$0xff] %v382
        %399 = vst [vmem:[%s221 + $0x30] sm:$0xff] %v387
        %400 = vst [vmem:[%s221 + $0x38] sm:$0xff] %v390
        %s401 = sand.u32 %s113, 1
        %s402 = scalar_lea.sflag [#allocation4], %s401
        %s403 = sand.u32 %s113, 1
        %s404 = smul.addr %s403, 64
        %s405 = scalar_lea.vmem [#allocation7], %s404
        // Predicated region
        $region41: #{tpu_custom_call.1} parent=31 // pred_check
          %p406 = pneg %p123
        $region42: #{tpu_custom_call.1} parent=31 // pred_check_branch
          %408 = sbr.rel (%p406) target = $region44
        $region43: #{tpu_custom_call.1} parent=31 // pred_region
          %s409 = smul.u32 8, %s26
          %s411 = ssub.s32 1024, 1024
          %412 = vsyncadd %s402, %s411
          %s413 = smul.addr %s25, 8
          %s414 = sadd.s32 %s409, %s413
          %s415 = smul.addr %s414, 128
          %s416 = scalar_lea.hbm %s3, %s415
          %s417 = sshll.u32 %s405, 4
          %s418 = int_to_ptr.vmem [resolvable:$true] %s417
          %423 = dma.vmem_to_hbm [thread:$0]  %s418, 1024, %s416, %s402, 128, 128, 8
        $region44: #{tpu_custom_call.1} parent=31 // pred_fallthru
          _
      $region32: #{tpu_custom_call.1} parent=5 // pred_fallthru
        _
      %p424 = scmp.le.s32.totalorder 2, %s16
      // Predicated region
      $region45: #{tpu_custom_call.1} parent=5 // pred_check
        %p425 = pneg %p424
      $region46: #{tpu_custom_call.1} parent=5 // pred_check_branch
        %427 = sbr.rel (%p425) target = $region48
      $region47: #{tpu_custom_call.1} parent=5 // pred_region
        %s428 = ssub.s32 %s16, 2
        // Predicated region
        $region49: #{tpu_custom_call.1} parent=47 // pred_check
          %p429 = pneg %p129
        $region50: #{tpu_custom_call.1} parent=47 // pred_check_branch
          %431 = sbr.rel (%p429) target = $region52
        $region51: #{tpu_custom_call.1} parent=47 // pred_region
          %s432 = sand.u32 %s114, 1
          %s433 = scalar_lea.sflag [#allocation4], %s432
          %s434 = sand.u32 %s114, 1
          %s435 = smul.addr %s434, 64
          %s436 = scalar_lea.vmem [#allocation7], %s435
          %437 = dma.done %s433, 1024
        $region52: #{tpu_custom_call.1} parent=47 // pred_fallthru
          _
      $region48: #{tpu_custom_call.1} parent=5 // pred_fallthru
        _
    $region6: #{tpu_custom_call.1} parent=1 // loop_footer
      %s20 = sadd.s32 1, %s16
    $region7: #{tpu_custom_call.1} parent=1 // loop_footer_branch
      %15 = sbr.rel target = $region3
    $region8: #{tpu_custom_call.1} parent=1 // loop_exit
      _
    %438 = vsyncpa [#allocation3], 1
    %s439 = scalar_lea.sflag [#allocation3], 1
    %440 = vsyncpa %s439, 1
    %441 = vsyncpa [#allocation6], 1
    %442 = vsyncpa [#allocation4], 1
    %s443 = scalar_lea.sflag [#allocation4], 1
    %444 = vsyncpa %s443, 1

</llo_original>
